<compile_context>
chip_gen: v7x
topology: tpu7x:2x2x1
jax: 0.10.0
libtpu: 0.0.40
codegen_flags: <defaults>
</compile_context>

<pallas_src>
import functools

import jax
import jax.numpy as jnp
from jax.experimental import pallas as pl
from jax.experimental.pallas import tpu as pltpu

_SUBLANE_MULT = {4: 8, 2: 16, 1: 32}
_TARGET_TILE_BYTES = 4 * 1024 * 1024   # 2 in + 2 out buffers = 16 MiB <= 32 MiB scoped
_VMEM_LIMIT_BYTES = 32 * 1024 * 1024


def _xor_sign_kernel(flip_ref, x_ref, o_ref):
    # Bit-exact sign flip for f32: XOR the sign bit, selected from the SMEM flag.
    mask = jnp.where(flip_ref[0] != 0, jnp.uint32(0x80000000), jnp.uint32(0))
    bits = pltpu.bitcast(x_ref[...], jnp.uint32) ^ mask
    o_ref[...] = pltpu.bitcast(bits, x_ref.dtype)


def _mul_sign_kernel(flip_ref, x_ref, o_ref):
    # Fallback for non-f32 dtypes: plain elementwise scale by +/-1.
    f = (1 - 2 * flip_ref[0]).astype(x_ref.dtype)
    o_ref[...] = f * x_ref[...]


def _pick_lane(total):
    # Largest multiple of 128 (capped at 8192) dividing the element count, so
    # the lane dimension stays dense and stores stay unmasked without padding.
    for c in range(8192, 127, -128):
        if total % c == 0:
            return c
    return None


def _sign_flip_pallas(x2, flip_flag, kernel, rows, lane, br, total_bytes):
    grid0 = pl.cdiv(rows, br)
    cost = pl.CostEstimate(flops=rows * lane, transcendentals=0,
                           bytes_accessed=2 * total_bytes)
    return pl.pallas_call(
        kernel,
        out_shape=jax.ShapeDtypeStruct(x2.shape, x2.dtype),
        grid=(grid0,),
        in_specs=[
            pl.BlockSpec(memory_space=pltpu.MemorySpace.SMEM),  # flip flag scalar
            pl.BlockSpec((br, lane), lambda i: (i, 0)),         # image row tile
        ],
        out_specs=pl.BlockSpec((br, lane), lambda i: (i, 0)),
        cost_estimate=cost,
        compiler_params=pltpu.CompilerParams(
            dimension_semantics=("parallel",),   # v7x shards rows across its 2 TCs
            vmem_limit_bytes=_VMEM_LIMIT_BYTES,
        ),
    )(flip_flag, x2)


def random_change_of_sign(img, key, p=0.5):
    """JAX/Pallas equivalent of RandomChangeOfSign.forward.

    factor = +1 with probability p (torch.rand(1) < p), else -1; out = factor*img.
    """
    orig_shape = img.shape
    total = img.size
    itemsize = jnp.dtype(img.dtype).itemsize

    # Static short-circuits: torch.rand(1) in [0,1) < p is always True for p>=1.
    if p >= 1.0:
        return img
    if p <= 0.0:
        flip = jnp.asarray(True)
    else:
        flip = jax.random.uniform(key, (), dtype=jnp.float32) >= p  # True => factor -1

    # Host-side short-circuit when the draw is concrete (not under jit): the +1
    # branch is an identity and needs no HBM round trip at all.
    try:
        flip_concrete = bool(flip)
    except Exception:
        flip_concrete = None
    if flip_concrete is False:
        return img
    if flip_concrete is True:
        flip_flag = jnp.ones((1,), jnp.int32)
    else:
        flip_flag = flip.astype(jnp.int32).reshape(1)

    kernel = _xor_sign_kernel if img.dtype == jnp.float32 else _mul_sign_kernel
    # TODO(synk): fuse the +/-1 flip into an adjacent kernel; standalone it pays
    # a full HBM read+write by construction.

    sublane_mult = _SUBLANE_MULT.get(itemsize, 8)

    lane = _pick_lane(total)
    if lane is None:
        # Ragged element count: pad the flat view up to a lane multiple so the
        # tiled, auto-pipelined path is used for every shape, then slice back.
        lane = 512
        padded = ((total + lane - 1) // lane) * lane
        flat = jnp.pad(img.reshape(-1), (0, padded - total))
        x2 = flat.reshape(padded // lane, lane)
        ragged = True
    else:
        x2 = img.reshape(total // lane, lane)
        ragged = False

    rows = x2.shape[0]
    row_bytes = lane * itemsize

    # Row tile sized to ~4 MiB (no artificial row cap), aligned to the packed
    # sublane multiple of the dtype.
    br = max(sublane_mult, _TARGET_TILE_BYTES // row_bytes)
    br = (br // sublane_mult) * sublane_mult

    if rows <= br:
        tile_bytes = rows * row_bytes
        if tile_bytes > (1 << 20) and rows >= 2 * sublane_mult:
            # Keep >= 2 parallel grid steps so both v7x TensorCores get work.
            half = -(-rows // 2)
            br = ((half + sublane_mult - 1) // sublane_mult) * sublane_mult
        else:
            br = rows  # single full-extent row block (exempt from (8,128) rule)

    out2 = _sign_flip_pallas(x2, flip_flag, kernel, rows, lane, br,
                             total_bytes=total * itemsize)

    if ragged:
        return out2.reshape(-1)[:total].reshape(orig_shape)
    return out2.reshape(orig_shape)


if __name__ == "__main__":
    key = jax.random.PRNGKey(0)
    k_img, k_sign, k_img2, k_sign2, k_sign3 = jax.random.split(key, 5)

    # NCHW input consistent with an "image" transform: (2, 4, 16, 16) f32.
    x = jax.random.normal(k_img, (2, 4, 16, 16), dtype=jnp.float32)

    # p=0 => factor is always -1: exercises the f32 XOR kernel (bit-exact flip).
    y_flip = jax.block_until_ready(random_change_of_sign(x, k_sign, p=0.0))
    assert y_flip.shape == x.shape and y_flip.dtype == x.dtype
    assert bool(jnp.all(y_flip == -x)), "p=0 path is not an exact sign flip"

    # p=1 => factor is always +1: identity short-circuit (no kernel launch).
    y_id = jax.block_until_ready(random_change_of_sign(x, k_sign, p=1.0))
    assert bool(jnp.all(y_id == x)), "p=1 path is not the identity"

    # Jitted / traced-key path: the flip flag is resolved inside the kernel.
    f_jit = jax.jit(functools.partial(random_change_of_sign, p=0.5))
    y_j = jax.block_until_ready(f_jit(x, k_sign3))
    assert bool(jnp.all(y_j == x)) or bool(jnp.all(y_j == -x)), \
        "jitted output is not a pure sign flip of the input"

    # Ragged element count (105) exercises the pad -> tiled -> slice-back path.
    x2 = jax.random.normal(k_img2, (1, 3, 5, 7), dtype=jnp.float32)
    y2 = jax.block_until_ready(random_change_of_sign(x2, k_sign2, p=0.0))
    assert bool(jnp.all(y2 == -x2)), "ragged path is not an exact sign flip"

    # bf16 goes through the multiply fallback kernel.
    x3 = x.astype(jnp.bfloat16)
    y3 = jax.block_until_ready(random_change_of_sign(x3, k_sign, p=0.0))
    assert bool(jnp.all(y3 == -x3)), "bf16 path is not a sign flip"

    print("KERNEL_OK")
</pallas_src>

<mosaic_0001>
module attributes {stable_mosaic.version = 11 : i64} {
  func.func @_xor_sign_kernel(%arg0: i32, %arg1: memref<1xi32, #tpu.memory_space<smem>>, %arg2: memref<1x2048xf32, #tpu.memory_space<vmem>>, %arg3: memref<1x2048xf32, #tpu.memory_space<vmem>>) attributes {dimension_semantics = [#tpu.dimension_semantics<parallel>], iteration_bounds = array<i64: 1>, scalar_prefetch = 0 : i64, scratch_operands = 0 : i64, tpu.core_type = #tpu.core_type<tc>, window_params = [{transform_indices = @transform_0, window_bounds = array<i64: 1>}, {transform_indices = @transform_1, window_bounds = array<i64: 1, 2048>}, {transform_indices = @transform_2, window_bounds = array<i64: 1, 2048>}]} {
    %c0 = arith.constant 0 : index
    %0 = memref.load %arg1[%c0] : memref<1xi32, #tpu.memory_space<smem>>
    %c0_i32 = arith.constant 0 : i32
    %1 = arith.cmpi ne, %0, %c0_i32 : i32
    %c-2147483648_i32 = arith.constant -2147483648 : i32
    %c0_i32_0 = arith.constant 0 : i32
    %2 = arith.select %1, %c-2147483648_i32, %c0_i32_0 : i32
    %c0_1 = arith.constant 0 : index
    %c0_2 = arith.constant 0 : index
    %3 = vector.load %arg2[%c0_1, %c0_2] : memref<1x2048xf32, #tpu.memory_space<vmem>>, vector<1x2048xf32>
    %4 = tpu.bitcast %3 : vector<1x2048xf32> -> vector<1x2048xi32>
    %5 = vector.broadcast %2 : i32 to vector<1x2048xi32>
    %6 = arith.xori %4, %5 : vector<1x2048xi32>
    %7 = tpu.bitcast %6 : vector<1x2048xi32> -> vector<1x2048xf32>
    %c0_3 = arith.constant 0 : index
    %c0_4 = arith.constant 0 : index
    %8 = vector.load %arg3[%c0_3, %c0_4] : memref<1x2048xf32, #tpu.memory_space<vmem>>, vector<1x2048xf32>
    tpu.vector_store %arg3[%c0_3, %c0_4], %7 {strides = array<i32>} : memref<1x2048xf32, #tpu.memory_space<vmem>>, vector<1x2048xf32>,
    return
  }
  func.func @transform_0(%arg0: i32) -> i32 {
    %c0_i32 = arith.constant 0 : i32
    %c0_i32_0 = arith.constant 0 : i32
    return %c0_i32 : i32
  }
  func.func @transform_1(%arg0: i32) -> (i32, i32) {
    %c0_i32 = arith.constant 0 : i32
    %c0_i32_0 = arith.constant 0 : i32
    return %arg0, %c0_i32 : i32, i32
  }
  func.func @transform_2(%arg0: i32) -> (i32, i32) {
    %c0_i32 = arith.constant 0 : i32
    %c0_i32_0 = arith.constant 0 : i32
    return %arg0, %c0_i32 : i32, i32
  }
}

</mosaic_0001>

<llo_original>
// kernel: tpu_custom_call.1
$region0: #{tpu_custom_call.1}
  #allocation0 [shape = 'u32[]', space=smem, size = 0x4, offset = 0x4, fixed_abs, tag = 'smem constant byte address 0x4 - core index']
  #allocation1 [shape = 'u32[144,128]{1,0:T(1,128)}', space=vmem, size = 0x12000, scoped, tag = 'internal scratch']
  #allocation2 [shape = 's32[1]{0:T(128)S(6)}', space=smem, size = 0x200, scoped, tag = 'scoped memory for tpu_custom_call.1']
  %s0 = inlined_call_operand.<no memory space> [shape: s32[1], index: 0, kind: input, shape index: {}]
  %s1 = inlined_call_operand.hbm [shape: f32[1,2048], index: 1, kind: input, shape index: {}]
  %s2 = inlined_call_operand.hbm [shape: f32[1,2048], index: 2, kind: output, shape index: {}]
  %s3 = sld [smem:[#allocation0]]
  $region22: #{tpu_custom_call.1} parent=0
    _
  %s5 = ssub.s32 1, %s3
  %s6 = scalar_select 0, %s5, %s3
  %7 = sst [smem:[#allocation2]] %s0
  $region1: #{tpu_custom_call.1} parent=0
    #allocation3 [shape = 'u8[8192]{0}', space=vmem, size = 0x2000, scoped, tag = 'input window, operand 1, single buffered']
    #allocation4 [shape = 's32[1]{0}', space=sflag, size = 0x4, scoped, tag = 'scoped memory for tpu_custom_call.1']
    #allocation5 [shape = 's32[1]{0}', space=sflag, size = 0x4, scoped, tag = 'scoped memory for tpu_custom_call.1']
    #allocation6 [shape = 'u8[8192]{0}', space=vmem, size = 0x2000, scoped, tag = 'output window, operand 0, single buffered']
    %8 = vsyncpa [#allocation4], 0
    %9 = vsyncpa [#allocation5], 0
    // Predicated region
    $region2: #{tpu_custom_call.1} parent=1 // pred_check
      _
    $region3: #{tpu_custom_call.1} parent=1 // pred_check_branch
      %11 = sbr.rel (0) target = $region5
    $region4: #{tpu_custom_call.1} parent=1 // pred_region
      _
    $region5: #{tpu_custom_call.1} parent=1 // pred_fallthru
      _
    // Predicated region
    $region6: #{tpu_custom_call.1} parent=1 // pred_check
      _
    $region7: #{tpu_custom_call.1} parent=1 // pred_check_branch
      %13 = sbr.rel (0) target = $region9
    $region8: #{tpu_custom_call.1} parent=1 // pred_region
      %s15 = ssub.s32 256, 256
      %16 = vsyncadd [#allocation4], %s15
      %s18 = sshll.u32 [#allocation3], 4
      %s19 = int_to_ptr.vmem [resolvable:$true] %s18
      %21 = dma.hbm_to_vmem [thread:$0]  %s1, 256, %s19, [#allocation4]
    $region9: #{tpu_custom_call.1} parent=1 // pred_fallthru
      _
    // Predicated region
    $region10: #{tpu_custom_call.1} parent=1 // pred_check
      _
    $region11: #{tpu_custom_call.1} parent=1 // pred_check_branch
      %23 = sbr.rel (0) target = $region13
    $region12: #{tpu_custom_call.1} parent=1 // pred_region
      %24 = dma.done [#allocation4], 256
    $region13: #{tpu_custom_call.1} parent=1 // pred_fallthru
      _
    %s25 = sld [smem:[#allocation2]]
    %p26 = scmp.ne.s32.totalorder %s25, 0
    %s27 = scalar_select %p26, 2147483648, 0
    %v28 = vld [vmem:[#allocation3] sm:$0xff]
    %v29 = vld [vmem:[#allocation3 + $0x8] sm:$0xff]
    %v32 = vlaneseq
    %v33 = vshrl.u32 %v32, 7
    %v34 = vsub.s32 0, %v33
    %v35 = vrot.slane %v28, %v34
    %v36 = vlaneseq
    %v37 = vshrl.u32 %v36, 7
    %v38 = vsub.s32 1, %v37
    %v39 = vrot.slane %v28, %v38
    %v40 = vlaneseq
    %v41 = vshrl.u32 %v40, 7
    %v42 = vsub.s32 2, %v41
    %v43 = vrot.slane %v28, %v42
    %v44 = vlaneseq
    %v45 = vshrl.u32 %v44, 7
    %v46 = vsub.s32 3, %v45
    %v47 = vrot.slane %v28, %v46
    %v48 = vlaneseq
    %v49 = vshrl.u32 %v48, 7
    %v50 = vsub.s32 4, %v49
    %v51 = vrot.slane %v28, %v50
    %v52 = vlaneseq
    %v53 = vshrl.u32 %v52, 7
    %v54 = vsub.s32 5, %v53
    %v55 = vrot.slane %v28, %v54
    %v56 = vlaneseq
    %v57 = vshrl.u32 %v56, 7
    %v58 = vsub.s32 6, %v57
    %v59 = vrot.slane %v28, %v58
    %v60 = vlaneseq
    %v61 = vshrl.u32 %v60, 7
    %v62 = vsub.s32 7, %v61
    %v63 = vrot.slane %v28, %v62
    %v64 = vlaneseq
    %v65 = vshrl.u32 %v64, 7
    %v66 = vsub.s32 0, %v65
    %v67 = vrot.slane %v29, %v66
    %v68 = vlaneseq
    %v69 = vshrl.u32 %v68, 7
    %v70 = vsub.s32 1, %v69
    %v71 = vrot.slane %v29, %v70
    %v72 = vlaneseq
    %v73 = vshrl.u32 %v72, 7
    %v74 = vsub.s32 2, %v73
    %v75 = vrot.slane %v29, %v74
    %v76 = vlaneseq
    %v77 = vshrl.u32 %v76, 7
    %v78 = vsub.s32 3, %v77
    %v79 = vrot.slane %v29, %v78
    %v80 = vlaneseq
    %v81 = vshrl.u32 %v80, 7
    %v82 = vsub.s32 4, %v81
    %v83 = vrot.slane %v29, %v82
    %v84 = vlaneseq
    %v85 = vshrl.u32 %v84, 7
    %v86 = vsub.s32 5, %v85
    %v87 = vrot.slane %v29, %v86
    %v88 = vlaneseq
    %v89 = vshrl.u32 %v88, 7
    %v90 = vsub.s32 6, %v89
    %v91 = vrot.slane %v29, %v90
    %v92 = vlaneseq
    %v93 = vshrl.u32 %v92, 7
    %v94 = vsub.s32 7, %v93
    %v95 = vrot.slane %v29, %v94
    %v96 = vstv %s27
    %v97 = vxor.u32 %v35, %v96
    %v98 = vxor.u32 %v39, %v96
    %v99 = vxor.u32 %v43, %v96
    %v100 = vxor.u32 %v47, %v96
    %v101 = vxor.u32 %v51, %v96
    %v102 = vxor.u32 %v55, %v96
    %v103 = vxor.u32 %v59, %v96
    %v104 = vxor.u32 %v63, %v96
    %v105 = vxor.u32 %v67, %v96
    %v106 = vxor.u32 %v71, %v96
    %v107 = vxor.u32 %v75, %v96
    %v108 = vxor.u32 %v79, %v96
    %v109 = vxor.u32 %v83, %v96
    %v110 = vxor.u32 %v87, %v96
    %v111 = vxor.u32 %v91, %v96
    %v112 = vxor.u32 %v95, %v96
    %v113 = vcombine.low %v97, %v98
    %v114 = vcombine.low %v99, %v100
    %v115 = vcombine.low %v101, %v102
    %v116 = vcombine.low %v103, %v104
    %v118 = vunpack.c.l.s4 1966171168
    %v119 = vunpack.c.0.s8 %v118
    %v120 = vlaneseq
    %v121 = vshrl.u32 %v120, 7
    %v122 = vsub.s32 %v119, %v121
    %v123 = vrot.slane %v113, %v122
    %v125 = vunpack.c.l.s4 1966171168
    %v126 = vunpack.c.0.s8 %v125
    %v127 = vlaneseq
    %v128 = vshrl.u32 %v127, 7
    %v129 = vsub.s32 %v126, %v128
    %v130 = vrot.slane %v114, %v129
    %v132 = vunpack.c.l.s4 1966171168
    %v133 = vunpack.c.0.s8 %v132
    %v134 = vlaneseq
    %v135 = vshrl.u32 %v134, 7
    %v136 = vsub.s32 %v133, %v135
    %v137 = vrot.slane %v115, %v136
    %v139 = vunpack.c.l.s4 1966171168
    %v140 = vunpack.c.0.s8 %v139
    %v141 = vlaneseq
    %v142 = vshrl.u32 %v141, 7
    %v143 = vsub.s32 %v140, %v142
    %v144 = vrot.slane %v116, %v143
    %v145 = vcombine.low %v123, %v130
    %v146 = vcombine.low %v137, %v144
    %v148 = vunpack.c.l.s4 1966171168
    %v149 = vunpack.c.0.s8 %v148
    %v150 = vlaneseq
    %v151 = vshrl.u32 %v150, 7
    %v152 = vsub.s32 %v149, %v151
    %v153 = vrot.slane %v145, %v152
    %v155 = vunpack.c.l.s4 1966171168
    %v156 = vunpack.c.0.s8 %v155
    %v157 = vlaneseq
    %v158 = vshrl.u32 %v157, 7
    %v159 = vsub.s32 %v156, %v158
    %v160 = vrot.slane %v146, %v159
    %v161 = vcombine.low %v153, %v160
    %v162 = vcombine.low %v105, %v106
    %v163 = vcombine.low %v107, %v108
    %v164 = vcombine.low %v109, %v110
    %v165 = vcombine.low %v111, %v112
    %v167 = vunpack.c.l.s4 1966171168
    %v168 = vunpack.c.0.s8 %v167
    %v169 = vlaneseq
    %v170 = vshrl.u32 %v169, 7
    %v171 = vsub.s32 %v168, %v170
    %v172 = vrot.slane %v162, %v171
    %v174 = vunpack.c.l.s4 1966171168
    %v175 = vunpack.c.0.s8 %v174
    %v176 = vlaneseq
    %v177 = vshrl.u32 %v176, 7
    %v178 = vsub.s32 %v175, %v177
    %v179 = vrot.slane %v163, %v178
    %v181 = vunpack.c.l.s4 1966171168
    %v182 = vunpack.c.0.s8 %v181
    %v183 = vlaneseq
    %v184 = vshrl.u32 %v183, 7
    %v185 = vsub.s32 %v182, %v184
    %v186 = vrot.slane %v164, %v185
    %v188 = vunpack.c.l.s4 1966171168
    %v189 = vunpack.c.0.s8 %v188
    %v190 = vlaneseq
    %v191 = vshrl.u32 %v190, 7
    %v192 = vsub.s32 %v189, %v191
    %v193 = vrot.slane %v165, %v192
    %v194 = vcombine.low %v172, %v179
    %v195 = vcombine.low %v186, %v193
    %v197 = vunpack.c.l.s4 1966171168
    %v198 = vunpack.c.0.s8 %v197
    %v199 = vlaneseq
    %v200 = vshrl.u32 %v199, 7
    %v201 = vsub.s32 %v198, %v200
    %v202 = vrot.slane %v194, %v201
    %v204 = vunpack.c.l.s4 1966171168
    %v205 = vunpack.c.0.s8 %v204
    %v206 = vlaneseq
    %v207 = vshrl.u32 %v206, 7
    %v208 = vsub.s32 %v205, %v207
    %v209 = vrot.slane %v195, %v208
    %v210 = vcombine.low %v202, %v209
    %213 = vst [vmem:[#allocation6] sm:$0xff] %v161
    %214 = vst [vmem:[#allocation6 + $0x8] sm:$0xff] %v210
    // Predicated region
    $region14: #{tpu_custom_call.1} parent=1 // pred_check
      _
    $region15: #{tpu_custom_call.1} parent=1 // pred_check_branch
      %216 = sbr.rel (0) target = $region17
    $region16: #{tpu_custom_call.1} parent=1 // pred_region
      %s218 = ssub.s32 256, 256
      %219 = vsyncadd [#allocation5], %s218
      %s221 = sshll.u32 [#allocation6], 4
      %s222 = int_to_ptr.vmem [resolvable:$true] %s221
      %224 = dma.vmem_to_hbm [thread:$0]  %s222, 256, %s2, [#allocation5]
    $region17: #{tpu_custom_call.1} parent=1 // pred_fallthru
      _
    // Predicated region
    $region18: #{tpu_custom_call.1} parent=1 // pred_check
      _
    $region19: #{tpu_custom_call.1} parent=1 // pred_check_branch
      %226 = sbr.rel (0) target = $region21
    $region20: #{tpu_custom_call.1} parent=1 // pred_region
      %227 = dma.done [#allocation5], 256
    $region21: #{tpu_custom_call.1} parent=1 // pred_fallthru
      _
    %228 = vsyncpa [#allocation4], 1
    %229 = vsyncpa [#allocation5], 1

</llo_original>
